<compile_context>
chip_gen: v7x
topology: tpu7x:2x2x1
jax: 0.10.0
libtpu: 0.0.40
codegen_flags: <defaults>
</compile_context>

<pallas_src>
import functools
import math

import jax
import jax.numpy as jnp
from jax.experimental import pallas as pl
from jax.experimental.pallas import tpu as pltpu

NEG_INF = -1e30          # finite "minus infinity" for padded class logits
H1, H2, OUT = 128, 128, 128   # lane-padded widths: 100->128, 50->128, 10->128


def _round_up(x, m):
    return (x + m - 1) // m * m


def mlp_logsoftmax_kernel(x_ref, w1_ref, b1_ref, w2_ref, b2_ref,
                          w3_ref, b3_ref, o_ref):
    # x tile: (tm, image_size) f32 straight from HBM; cast to bf16 only for the MXU.
    x = x_ref[...].astype(jnp.bfloat16)

    h1 = jnp.dot(x, w1_ref[...], preferred_element_type=jnp.float32) + b1_ref[...]
    h1 = jnp.maximum(h1, 0.0)                      # f32 ReLU (VPU)

    h2 = jnp.dot(h1.astype(jnp.bfloat16), w2_ref[...],
                 preferred_element_type=jnp.float32) + b2_ref[...]
    h2 = jnp.maximum(h2, 0.0)

    logits = jnp.dot(h2.astype(jnp.bfloat16), w3_ref[...],
                     preferred_element_type=jnp.float32) + b3_ref[...]

    # Padded class columns carry -1e30 from b3 -> exp() underflows to 0 in f32,
    # so the 128-wide log_softmax equals the 10-wide one on the real columns.
    m = jnp.max(logits, axis=-1, keepdims=True)
    shifted = logits - m
    lse = jnp.log(jnp.sum(jnp.exp(shifted), axis=-1, keepdims=True))
    # f32 epilogue throughout; cast only at the lane-dense (tm, 128) store.
    o_ref[...] = (shifted - lse).astype(o_ref.dtype)


def init_params(key, image_size):
    """torch.nn.Linear-style init (U[-1/sqrt(fan_in), 1/sqrt(fan_in)]),
    weights stored [in, out] (transposed vs torch's [out, in])."""
    dims = [(image_size, 100), (100, 50), (50, 10)]
    params = []
    for fan_in, fan_out in dims:
        key, kw, kb = jax.random.split(key, 3)
        bound = 1.0 / math.sqrt(fan_in)
        w = jax.random.uniform(kw, (fan_in, fan_out), jnp.float32, -bound, bound)
        b = jax.random.uniform(kb, (fan_out,), jnp.float32, -bound, bound)
        params.append((w, b))
    return params


def pack_params(params, image_size):
    """Pad output dims to 128 and cast weights to bf16.  K of W1 stays at
    image_size (x is fed unpadded).  Zero padding is a no-op through
    matmul+ReLU; padded class biases are -1e30 so they vanish in softmax."""
    (w1, b1), (w2, b2), (w3, b3) = params

    def pad_w(w, rows, cols):
        z = jnp.zeros((rows, cols), jnp.float32)
        return z.at[:w.shape[0], :w.shape[1]].set(w).astype(jnp.bfloat16)

    W1 = pad_w(w1, image_size, H1)      # (image_size, 128) -- no K padding
    W2 = pad_w(w2, H1, H2)
    W3 = pad_w(w3, H2, OUT)
    B1 = jnp.zeros((1, H1), jnp.float32).at[0, :b1.shape[0]].set(b1)
    B2 = jnp.zeros((1, H2), jnp.float32).at[0, :b2.shape[0]].set(b2)
    B3 = jnp.full((1, OUT), NEG_INF, jnp.float32).at[0, :b3.shape[0]].set(b3)
    return (W1, B1, W2, B2, W3, B3)


def _choose_tm(b_pad, tm_max=1024):
    """Batch tile: as large as possible (HBM roofline saturates ~512-1024 rows),
    but keep >= 2 grid steps for bigger batches so v7x's 2 TCs both get work."""
    if b_pad <= 32:
        return b_pad                     # tiny batch: single grid step
    return min(tm_max, _round_up(-(-b_pad // 2), 16))


def model_c_forward(x, packed, image_size):
    """Equivalent of ModelC.forward (eval mode): returns log_softmax logits [B, 10]."""
    xf = x.reshape(-1, image_size).astype(jnp.float32)   # x.view(-1, image_size)
    B = xf.shape[0]
    W1, B1, W2, B2, W3, B3 = packed

    # Pad batch only to a 16-row multiple (bf16 sublane pair); padded rows are
    # zeros and are sliced off below.  No full-tile zero padding of the batch.
    b_pad = _round_up(B, 16)
    if b_pad != B:
        xf = jnp.pad(xf, ((0, b_pad - B), (0, 0)))

    tm = _choose_tm(b_pad)
    grid = (pl.cdiv(b_pad, tm),)

    resident = lambda arr: pl.BlockSpec(arr.shape, lambda i: (0, 0))

    cost = pl.CostEstimate(
        flops=int(2 * b_pad * (image_size * H1 + H1 * H2 + H2 * OUT)),
        transcendentals=int(b_pad * (OUT + 1)),                 # exp + log
        bytes_accessed=int(b_pad * image_size * 4               # x (f32)
                           + b_pad * OUT * 2                    # out (bf16)
                           + (image_size * H1 + H1 * H2 + H2 * OUT) * 2
                           + 3 * OUT * 4),                      # biases
    )

    out = pl.pallas_call(
        mlp_logsoftmax_kernel,
        out_shape=jax.ShapeDtypeStruct((b_pad, OUT), jnp.bfloat16),
        grid=grid,
        in_specs=[
            pl.BlockSpec((tm, image_size), lambda i: (i, 0)),   # x: tiled over batch
            resident(W1), resident(B1),                         # weights: VMEM-resident
            resident(W2), resident(B2),
            resident(W3), resident(B3),
        ],
        out_specs=pl.BlockSpec((tm, OUT), lambda i: (i, 0)),
        compiler_params=pltpu.CompilerParams(
            dimension_semantics=("parallel",)),                 # megacore on v7x
        cost_estimate=cost,
    )(xf, W1, B1, W2, B2, W3, B3)

    # Slice + cast on the (already bf16-halved) buffer; fuses under caller's jit.
    return out[:B, :10].astype(jnp.float32)


def _reference(x, params, image_size):
    """Pure-JAX f32 reference of the PyTorch forward (eval mode)."""
    (w1, b1), (w2, b2), (w3, b3) = params
    h = x.reshape(-1, image_size).astype(jnp.float32)
    h = jnp.maximum(h @ w1 + b1, 0.0)
    h = jnp.maximum(h @ w2 + b2, 0.0)
    logits = h @ w3 + b3
    return jax.nn.log_softmax(logits, axis=-1)


if __name__ == "__main__":
    # Small shapes consistent with the module: NCHW input [2, 4, 8, 8]
    # => image_size = 4 * 8 * 8 = 256.
    B, C, Hh, Ww = 2, 4, 8, 8
    image_size = C * Hh * Ww

    key = jax.random.PRNGKey(0)
    kx, kp = jax.random.split(key)
    x = jax.random.normal(kx, (B, C, Hh, Ww), dtype=jnp.float32)

    params = init_params(kp, image_size)
    packed = pack_params(params, image_size)

    fwd = jax.jit(functools.partial(model_c_forward, packed=packed,
                                    image_size=image_size))
    out = jax.block_until_ready(fwd(x))

    assert out.shape == (B, 10)
    # log_softmax rows must (approximately) exponentiate-sum to 1
    # (bf16 output store loosens this slightly vs pure f32).
    row_sums = jnp.sum(jnp.exp(out), axis=1)
    assert bool(jnp.all(jnp.abs(row_sums - 1.0) < 2e-2))
    # Matches the f32 reference up to bf16 matmul / output rounding.
    ref = _reference(x, params, image_size)
    assert bool(jnp.max(jnp.abs(out - ref)) < 0.1)

    print("KERNEL_OK")
</pallas_src>

<mosaic_0001>
module attributes {stable_mosaic.version = 11 : i64} {
  func.func @mlp_logsoftmax_kernel(%arg0: i32, %arg1: memref<16x256xf32, #tpu.memory_space<vmem>>, %arg2: memref<256x128xbf16, #tpu.memory_space<vmem>>, %arg3: memref<1x128xf32, #tpu.memory_space<vmem>>, %arg4: memref<128x128xbf16, #tpu.memory_space<vmem>>, %arg5: memref<1x128xf32, #tpu.memory_space<vmem>>, %arg6: memref<128x128xbf16, #tpu.memory_space<vmem>>, %arg7: memref<1x128xf32, #tpu.memory_space<vmem>>, %arg8: memref<16x128xbf16, #tpu.memory_space<vmem>>) attributes {dimension_semantics = [#tpu.dimension_semantics<parallel>], iteration_bounds = array<i64: 1>, scalar_prefetch = 0 : i64, scratch_operands = 0 : i64, tpu.core_type = #tpu.core_type<tc>, window_params = [{transform_indices = @transform_0, window_bounds = array<i64: 16, 256>}, {pipeline_mode = #tpu.pipeline_mode<synchronous>, transform_indices = @transform_1, window_bounds = array<i64: 256, 128>}, {pipeline_mode = #tpu.pipeline_mode<synchronous>, transform_indices = @transform_2, window_bounds = array<i64: 1, 128>}, {pipeline_mode = #tpu.pipeline_mode<synchronous>, transform_indices = @transform_3, window_bounds = array<i64: 128, 128>}, {pipeline_mode = #tpu.pipeline_mode<synchronous>, transform_indices = @transform_4, window_bounds = array<i64: 1, 128>}, {pipeline_mode = #tpu.pipeline_mode<synchronous>, transform_indices = @transform_5, window_bounds = array<i64: 128, 128>}, {pipeline_mode = #tpu.pipeline_mode<synchronous>, transform_indices = @transform_6, window_bounds = array<i64: 1, 128>}, {transform_indices = @transform_7, window_bounds = array<i64: 16, 128>}]} {
    %c0 = arith.constant 0 : index
    %c0_0 = arith.constant 0 : index
    %0 = vector.load %arg1[%c0, %c0_0] : memref<16x256xf32, #tpu.memory_space<vmem>>, vector<16x256xf32>
    %1 = arith.truncf %0 : vector<16x256xf32> to vector<16x256xbf16>
    %c0_1 = arith.constant 0 : index
    %c0_2 = arith.constant 0 : index
    %2 = vector.load %arg2[%c0_1, %c0_2] : memref<256x128xbf16, #tpu.memory_space<vmem>>, vector<256x128xbf16>
    %cst = arith.constant dense<0.000000e+00> : vector<16x128xf32>
    %3 = tpu.matmul %1, %2, %cst {dimension_numbers = #tpu.dot_dimension_numbers<[1], [0], [0], [1], [0, 0, 1, 1], [], []>} : vector<16x256xbf16>, vector<256x128xbf16>, vector<16x128xf32> -> vector<16x128xf32>
    %c0_3 = arith.constant 0 : index
    %c0_4 = arith.constant 0 : index
    %4 = vector.load %arg3[%c0_3, %c0_4] : memref<1x128xf32, #tpu.memory_space<vmem>>, vector<1x128xf32>
    %5 = vector.broadcast %4 : vector<1x128xf32> to vector<16x128xf32>
    %6 = arith.addf %3, %5 : vector<16x128xf32>
    %cst_5 = arith.constant 0.000000e+00 : f32
    %7 = vector.broadcast %cst_5 : f32 to vector<16x128xf32>
    %8 = arith.maximumf %6, %7 : vector<16x128xf32>
    %9 = arith.truncf %8 : vector<16x128xf32> to vector<16x128xbf16>
    %c0_6 = arith.constant 0 : index
    %c0_7 = arith.constant 0 : index
    %10 = vector.load %arg4[%c0_6, %c0_7] : memref<128x128xbf16, #tpu.memory_space<vmem>>, vector<128x128xbf16>
    %cst_8 = arith.constant dense<0.000000e+00> : vector<16x128xf32>
    %11 = tpu.matmul %9, %10, %cst_8 {dimension_numbers = #tpu.dot_dimension_numbers<[1], [0], [0], [1], [0, 0, 1, 1], [], []>} : vector<16x128xbf16>, vector<128x128xbf16>, vector<16x128xf32> -> vector<16x128xf32>
    %c0_9 = arith.constant 0 : index
    %c0_10 = arith.constant 0 : index
    %12 = vector.load %arg5[%c0_9, %c0_10] : memref<1x128xf32, #tpu.memory_space<vmem>>, vector<1x128xf32>
    %13 = vector.broadcast %12 : vector<1x128xf32> to vector<16x128xf32>
    %14 = arith.addf %11, %13 : vector<16x128xf32>
    %cst_11 = arith.constant 0.000000e+00 : f32
    %15 = vector.broadcast %cst_11 : f32 to vector<16x128xf32>
    %16 = arith.maximumf %14, %15 : vector<16x128xf32>
    %17 = arith.truncf %16 : vector<16x128xf32> to vector<16x128xbf16>
    %c0_12 = arith.constant 0 : index
    %c0_13 = arith.constant 0 : index
    %18 = vector.load %arg6[%c0_12, %c0_13] : memref<128x128xbf16, #tpu.memory_space<vmem>>, vector<128x128xbf16>
    %cst_14 = arith.constant dense<0.000000e+00> : vector<16x128xf32>
    %19 = tpu.matmul %17, %18, %cst_14 {dimension_numbers = #tpu.dot_dimension_numbers<[1], [0], [0], [1], [0, 0, 1, 1], [], []>} : vector<16x128xbf16>, vector<128x128xbf16>, vector<16x128xf32> -> vector<16x128xf32>
    %c0_15 = arith.constant 0 : index
    %c0_16 = arith.constant 0 : index
    %20 = vector.load %arg7[%c0_15, %c0_16] : memref<1x128xf32, #tpu.memory_space<vmem>>, vector<1x128xf32>
    %21 = vector.broadcast %20 : vector<1x128xf32> to vector<16x128xf32>
    %22 = arith.addf %19, %21 : vector<16x128xf32>
    %cst_17 = arith.constant dense<0xFF800000> : vector<16xf32>
    %23 = vector.multi_reduction <maximumf>, %22, %cst_17 [1] : vector<16x128xf32> to vector<16xf32>
    %24 = vector.shape_cast %23 : vector<16xf32> to vector<16x1xf32>
    %25 = vector.broadcast %24 : vector<16x1xf32> to vector<16x128xf32>
    %26 = arith.subf %22, %25 : vector<16x128xf32>
    %27 = math.exp %26 : vector<16x128xf32>
    %cst_18 = arith.constant dense<0.000000e+00> : vector<16xf32>
    %28 = vector.multi_reduction <add>, %27, %cst_18 [1] : vector<16x128xf32> to vector<16xf32>
    %29 = vector.shape_cast %28 : vector<16xf32> to vector<16x1xf32>
    %30 = math.log %29 : vector<16x1xf32>
    %31 = vector.broadcast %30 : vector<16x1xf32> to vector<16x128xf32>
    %32 = arith.subf %26, %31 : vector<16x128xf32>
    %33 = arith.truncf %32 : vector<16x128xf32> to vector<16x128xbf16>
    %c0_19 = arith.constant 0 : index
    %c0_20 = arith.constant 0 : index
    %34 = vector.load %arg8[%c0_19, %c0_20] : memref<16x128xbf16, #tpu.memory_space<vmem>>, vector<16x128xbf16>
    tpu.vector_store %arg8[%c0_19, %c0_20], %33 {strides = array<i32>} : memref<16x128xbf16, #tpu.memory_space<vmem>>, vector<16x128xbf16>,
    return
  }
  func.func @transform_0(%arg0: i32) -> (i32, i32) {
    %c0_i32 = arith.constant 0 : i32
    %c0_i32_0 = arith.constant 0 : i32
    return %arg0, %c0_i32 : i32, i32
  }
  func.func @transform_1(%arg0: i32) -> (i32, i32) {
    %c0_i32 = arith.constant 0 : i32
    %c0_i32_0 = arith.constant 0 : i32
    %c0_i32_1 = arith.constant 0 : i32
    return %c0_i32, %c0_i32_0 : i32, i32
  }
  func.func @transform_2(%arg0: i32) -> (i32, i32) {
    %c0_i32 = arith.constant 0 : i32
    %c0_i32_0 = arith.constant 0 : i32
    %c0_i32_1 = arith.constant 0 : i32
    return %c0_i32, %c0_i32_0 : i32, i32
  }
  func.func @transform_3(%arg0: i32) -> (i32, i32) {
    %c0_i32 = arith.constant 0 : i32
    %c0_i32_0 = arith.constant 0 : i32
    %c0_i32_1 = arith.constant 0 : i32
    return %c0_i32, %c0_i32_0 : i32, i32
  }
  func.func @transform_4(%arg0: i32) -> (i32, i32) {
    %c0_i32 = arith.constant 0 : i32
    %c0_i32_0 = arith.constant 0 : i32
    %c0_i32_1 = arith.constant 0 : i32
    return %c0_i32, %c0_i32_0 : i32, i32
  }
  func.func @transform_5(%arg0: i32) -> (i32, i32) {
    %c0_i32 = arith.constant 0 : i32
    %c0_i32_0 = arith.constant 0 : i32
    %c0_i32_1 = arith.constant 0 : i32
    return %c0_i32, %c0_i32_0 : i32, i32
  }
  func.func @transform_6(%arg0: i32) -> (i32, i32) {
    %c0_i32 = arith.constant 0 : i32
    %c0_i32_0 = arith.constant 0 : i32
    %c0_i32_1 = arith.constant 0 : i32
    return %c0_i32, %c0_i32_0 : i32, i32
  }
  func.func @transform_7(%arg0: i32) -> (i32, i32) {
    %c0_i32 = arith.constant 0 : i32
    %c0_i32_0 = arith.constant 0 : i32
    return %arg0, %c0_i32 : i32, i32
  }
}

</mosaic_0001>

<llo_original>
// kernel: model_c_forward.1
$region0: #{model_c_forward.1}
  #allocation0 [shape = 'u32[]', space=smem, size = 0x4, offset = 0x4, fixed_abs, tag = 'smem constant byte address 0x4 - core index']
  #allocation1 [shape = 'u32[144,128]{1,0:T(1,128)}', space=vmem, size = 0x12000, scoped, tag = 'internal scratch']
  %s0 = inlined_call_operand.vmem [shape: f32[16,256], index: 0, kind: input, shape index: {}]
  %s1 = inlined_call_operand.vmem [shape: bf16[256,128], index: 1, kind: input, shape index: {}]
  %s2 = inlined_call_operand.vmem [shape: f32[1,128], index: 2, kind: input, shape index: {}]
  %s3 = inlined_call_operand.hbm [shape: bf16[128,128], index: 3, kind: input, shape index: {}]
  %s4 = inlined_call_operand.vmem [shape: f32[1,128], index: 4, kind: input, shape index: {}]
  %s5 = inlined_call_operand.hbm [shape: bf16[128,128], index: 5, kind: input, shape index: {}]
  %s6 = inlined_call_operand.vmem [shape: f32[1,128], index: 6, kind: input, shape index: {}]
  %s7 = inlined_call_operand.vmem [shape: bf16[16,128], index: 7, kind: output, shape index: {}]
  %s8 = sld [smem:[#allocation0]]
  $region46: #{model_c_forward.1} parent=0
    _
  %s10 = ssub.s32 1, %s8
  %s11 = scalar_select 0, %s10, %s8
  $region1: #{model_c_forward.1} parent=0
    #allocation2 [shape = 'u8[32768]{0}', space=vmem, size = 0x8000, scoped, tag = 'input window, operand 3, single buffered']
    #allocation3 [shape = 's32[1]{0}', space=sflag, size = 0x4, scoped, tag = 'scoped memory for model_c_forward.1']
    #allocation4 [shape = 'u8[32768]{0}', space=vmem, size = 0x8000, scoped, tag = 'input window, operand 5, single buffered']
    #allocation5 [shape = 's32[1]{0}', space=sflag, size = 0x4, scoped, tag = 'scoped memory for model_c_forward.1']
    %12 = vsyncpa [#allocation3], 0
    %13 = vsyncpa [#allocation5], 0
    // Predicated region
    $region2: #{model_c_forward.1} parent=1 // pred_check
      _
    $region3: #{model_c_forward.1} parent=1 // pred_check_branch
      %15 = sbr.rel (0) target = $region5
    $region4: #{model_c_forward.1} parent=1 // pred_region
      _
    $region5: #{model_c_forward.1} parent=1 // pred_fallthru
      _
    // Predicated region
    $region6: #{model_c_forward.1} parent=1 // pred_check
      _
    $region7: #{model_c_forward.1} parent=1 // pred_check_branch
      %17 = sbr.rel (0) target = $region9
    $region8: #{model_c_forward.1} parent=1 // pred_region
      _
    $region9: #{model_c_forward.1} parent=1 // pred_fallthru
      _
    // Predicated region
    $region10: #{model_c_forward.1} parent=1 // pred_check
      _
    $region11: #{model_c_forward.1} parent=1 // pred_check_branch
      %19 = sbr.rel (0) target = $region13
    $region12: #{model_c_forward.1} parent=1 // pred_region
      _
    $region13: #{model_c_forward.1} parent=1 // pred_fallthru
      _
    // Predicated region
    $region14: #{model_c_forward.1} parent=1 // pred_check
      _
    $region15: #{model_c_forward.1} parent=1 // pred_check_branch
      %21 = sbr.rel (0) target = $region17
    $region16: #{model_c_forward.1} parent=1 // pred_region
      %s23 = ssub.s32 1024, 1024
      %24 = vsyncadd [#allocation3], %s23
      %s25 = sshll.u32 [#allocation2], 4
      %s26 = int_to_ptr.vmem [resolvable:$true] %s25
      %31 = dma.hbm_to_vmem [thread:$0]  %s3, 1024, %s26, [#allocation3], 64, 64, 4
    $region17: #{model_c_forward.1} parent=1 // pred_fallthru
      _
    // Predicated region
    $region18: #{model_c_forward.1} parent=1 // pred_check
      _
    $region19: #{model_c_forward.1} parent=1 // pred_check_branch
      %33 = sbr.rel (0) target = $region21
    $region20: #{model_c_forward.1} parent=1 // pred_region
      _
    $region21: #{model_c_forward.1} parent=1 // pred_fallthru
      _
    // Predicated region
    $region22: #{model_c_forward.1} parent=1 // pred_check
      _
    $region23: #{model_c_forward.1} parent=1 // pred_check_branch
      %35 = sbr.rel (0) target = $region25
    $region24: #{model_c_forward.1} parent=1 // pred_region
      %s37 = ssub.s32 1024, 1024
      %38 = vsyncadd [#allocation5], %s37
      %s39 = sshll.u32 [#allocation4], 4
      %s40 = int_to_ptr.vmem [resolvable:$true] %s39
      %45 = dma.hbm_to_vmem [thread:$0]  %s5, 1024, %s40, [#allocation5], 64, 64, 4
    $region25: #{model_c_forward.1} parent=1 // pred_fallthru
      _
    // Predicated region
    $region26: #{model_c_forward.1} parent=1 // pred_check
      _
    $region27: #{model_c_forward.1} parent=1 // pred_check_branch
      %47 = sbr.rel (0) target = $region29
    $region28: #{model_c_forward.1} parent=1 // pred_region
      _
    $region29: #{model_c_forward.1} parent=1 // pred_fallthru
      _
    // Predicated region
    $region30: #{model_c_forward.1} parent=1 // pred_check
      _
    $region31: #{model_c_forward.1} parent=1 // pred_check_branch
      %49 = sbr.rel (0) target = $region33
    $region32: #{model_c_forward.1} parent=1 // pred_region
      %50 = dma.done [#allocation3], 1024
    $region33: #{model_c_forward.1} parent=1 // pred_fallthru
      _
    // Predicated region
    $region34: #{model_c_forward.1} parent=1 // pred_check
      _
    $region35: #{model_c_forward.1} parent=1 // pred_check_branch
      %52 = sbr.rel (0) target = $region37
    $region36: #{model_c_forward.1} parent=1 // pred_region
      %53 = dma.done [#allocation5], 1024
    $region37: #{model_c_forward.1} parent=1 // pred_fallthru
      _
    %v55 = vld [vmem:[%s0] sm:$0xff]
    %v56 = vld [vmem:[%s0 + $0x8] sm:$0xff]
    %v57 = vld [vmem:[%s0 + $0x10] sm:$0xff]
    %v58 = vld [vmem:[%s0 + $0x18] sm:$0xff]
    %v59 = vpack.c.bf16 %v57, %v55
    %v60 = vpack.c.bf16 %v58, %v56
    %v61 = vld [vmem:[%s1] sm:$0xf]
    %v62 = vld [vmem:[%s1 + $0x4] sm:$0xf]
    %v63 = vld [vmem:[%s1 + $0x8] sm:$0xf]
    %v64 = vld [vmem:[%s1 + $0xc] sm:$0xf]
    %v65 = vld [vmem:[%s1 + $0x10] sm:$0xf]
    %v66 = vld [vmem:[%s1 + $0x14] sm:$0xf]
    %v67 = vld [vmem:[%s1 + $0x18] sm:$0xf]
    %v68 = vld [vmem:[%s1 + $0x1c] sm:$0xf]
    %v69 = vld [vmem:[%s1 + $0x20] sm:$0xf]
    %v70 = vld [vmem:[%s1 + $0x24] sm:$0xf]
    %v71 = vld [vmem:[%s1 + $0x28] sm:$0xf]
    %v72 = vld [vmem:[%s1 + $0x2c] sm:$0xf]
    %v73 = vld [vmem:[%s1 + $0x30] sm:$0xf]
    %v74 = vld [vmem:[%s1 + $0x34] sm:$0xf]
    %v75 = vld [vmem:[%s1 + $0x38] sm:$0xf]
    %v76 = vld [vmem:[%s1 + $0x3c] sm:$0xf]
    %v77 = vld [vmem:[%s1 + $0x40] sm:$0xf]
    %v78 = vld [vmem:[%s1 + $0x44] sm:$0xf]
    %v79 = vld [vmem:[%s1 + $0x48] sm:$0xf]
    %v80 = vld [vmem:[%s1 + $0x4c] sm:$0xf]
    %v81 = vld [vmem:[%s1 + $0x50] sm:$0xf]
    %v82 = vld [vmem:[%s1 + $0x54] sm:$0xf]
    %v83 = vld [vmem:[%s1 + $0x58] sm:$0xf]
    %v84 = vld [vmem:[%s1 + $0x5c] sm:$0xf]
    %v85 = vld [vmem:[%s1 + $0x60] sm:$0xf]
    %v86 = vld [vmem:[%s1 + $0x64] sm:$0xf]
    %v87 = vld [vmem:[%s1 + $0x68] sm:$0xf]
    %v88 = vld [vmem:[%s1 + $0x6c] sm:$0xf]
    %v89 = vld [vmem:[%s1 + $0x70] sm:$0xf]
    %v90 = vld [vmem:[%s1 + $0x74] sm:$0xf]
    %v91 = vld [vmem:[%s1 + $0x78] sm:$0xf]
    %v92 = vld [vmem:[%s1 + $0x7c] sm:$0xf]
    %v93 = vld [vmem:[%s2] sm:$0x1]
    %v95 = vlaneseq
    %v96 = vshrl.u32 %v95, 7
    %v97 = vsub.s32 0, %v96
    %v98 = vrot.slane %v93, %v97
    %v132 = vunpack.c.l.b16 %v61
    %v133 = vunpack.c.l.b16 %v62
    %v134 = vunpack.c.l.b16 %v63
    %v135 = vunpack.c.l.b16 %v64
    %v136 = vunpack.c.l.b16 %v65
    %v137 = vunpack.c.l.b16 %v66
    %v138 = vunpack.c.l.b16 %v67
    %v139 = vunpack.c.l.b16 %v68
    %v140 = vunpack.c.l.b16 %v69
    %v141 = vunpack.c.l.b16 %v70
    %v142 = vunpack.c.l.b16 %v71
    %v143 = vunpack.c.l.b16 %v72
    %v144 = vunpack.c.l.b16 %v73
    %v145 = vunpack.c.l.b16 %v74
    %v146 = vunpack.c.l.b16 %v75
    %v147 = vunpack.c.l.b16 %v76
    %v148 = vunpack.c.l.b16 %v77
    %v149 = vunpack.c.l.b16 %v78
    %v150 = vunpack.c.l.b16 %v79
    %v151 = vunpack.c.l.b16 %v80
    %v152 = vunpack.c.l.b16 %v81
    %v153 = vunpack.c.l.b16 %v82
    %v154 = vunpack.c.l.b16 %v83
    %v155 = vunpack.c.l.b16 %v84
    %v156 = vunpack.c.l.b16 %v85
    %v157 = vunpack.c.l.b16 %v86
    %v158 = vunpack.c.l.b16 %v87
    %v159 = vunpack.c.l.b16 %v88
    %v160 = vunpack.c.l.b16 %v89
    %v161 = vunpack.c.l.b16 %v90
    %v162 = vunpack.c.l.b16 %v91
    %v163 = vunpack.c.l.b16 %v92
    %v164 = vpack.c.b16 %v133, %v132
    %v165 = vpack.c.b16 %v135, %v134
    %v166 = vpack.c.b16 %v137, %v136
    %v167 = vpack.c.b16 %v139, %v138
    %v168 = vpack.c.b16 %v141, %v140
    %v169 = vpack.c.b16 %v143, %v142
    %v170 = vpack.c.b16 %v145, %v144
    %v171 = vpack.c.b16 %v147, %v146
    %v172 = vpack.c.b16 %v149, %v148
    %v173 = vpack.c.b16 %v151, %v150
    %v174 = vpack.c.b16 %v153, %v152
    %v175 = vpack.c.b16 %v155, %v154
    %v176 = vpack.c.b16 %v157, %v156
    %v177 = vpack.c.b16 %v159, %v158
    %v178 = vpack.c.b16 %v161, %v160
    %v179 = vpack.c.b16 %v163, %v162
    %196 = vmatprep.subr.bf16.mxu0 0
    %197 = vmatpush1.bf16.msra.mxu0 %v164
    %198 = vmatprep.subr.bf16.mxu0 0
    %199 = vmatpush1.bf16.msra.mxu0 %v165
    %200 = vmatprep.subr.bf16.mxu0 0
    %201 = vmatpush1.bf16.msra.mxu0 %v166
    %202 = vmatprep.subr.bf16.mxu0 0
    %203 = vmatpush1.bf16.msra.mxu0 %v167
    %204 = vmatprep.subr.bf16.mxu0 0
    %205 = vmatpush1.bf16.msra.mxu0 %v168
    %206 = vmatprep.subr.bf16.mxu0 0
    %207 = vmatpush1.bf16.msra.mxu0 %v169
    %208 = vmatprep.subr.bf16.mxu0 0
    %209 = vmatpush1.bf16.msra.mxu0 %v170
    %210 = vmatprep.subr.bf16.mxu0 0
    %211 = vmatpush1.bf16.msra.mxu0 %v171
    %212 = vmatprep.subr.bf16.mxu0 0
    %213 = vmatpush1.bf16.msra.mxu0 %v172
    %214 = vmatprep.subr.bf16.mxu0 0
    %215 = vmatpush1.bf16.msra.mxu0 %v173
    %216 = vmatprep.subr.bf16.mxu0 0
    %217 = vmatpush1.bf16.msra.mxu0 %v174
    %218 = vmatprep.subr.bf16.mxu0 0
    %219 = vmatpush1.bf16.msra.mxu0 %v175
    %220 = vmatprep.subr.bf16.mxu0 0
    %221 = vmatpush1.bf16.msra.mxu0 %v176
    %222 = vmatprep.subr.bf16.mxu0 0
    %223 = vmatpush1.bf16.msra.mxu0 %v177
    %224 = vmatprep.subr.bf16.mxu0 0
    %225 = vmatpush1.bf16.msra.mxu0 %v178
    %226 = vmatprep.subr.bf16.mxu0 0
    %227 = vmatpush1.bf16.msra.mxu0 %v179
    %228 = vmatprep.mubr.bf16.mxu0 %v60
    %229 = vmatmul.mubr.bf16.gmra.mrb[0].mxu0 %v59
    %v230 = vpop.f32.mrb[0].mxu0
    %v231 = vadd.f32 %v98, %v230
    %v232 = vpop.f32.mrb[0].mxu0
    %v233 = vpop.f32.mrb[0].mxu0
    %v234 = vadd.f32 %v98, %v233
    %v235 = vpop.f32.mrb[0].mxu0
    %236 = vdwg.mxu0
    %v237 = vmax.f32 %v231, 0.0
    %v238 = vmax.f32 %v234, 0.0
    %v239 = vpack.c.bf16 %v238, %v237
    %v240 = vld [vmem:[#allocation2] sm:$0xf]
    %v241 = vld [vmem:[#allocation2 + $0x4] sm:$0xf]
    %v242 = vld [vmem:[#allocation2 + $0x8] sm:$0xf]
    %v243 = vld [vmem:[#allocation2 + $0xc] sm:$0xf]
    %v244 = vld [vmem:[#allocation2 + $0x10] sm:$0xf]
    %v245 = vld [vmem:[#allocation2 + $0x14] sm:$0xf]
    %v246 = vld [vmem:[#allocation2 + $0x18] sm:$0xf]
    %v247 = vld [vmem:[#allocation2 + $0x1c] sm:$0xf]
    %v248 = vld [vmem:[#allocation2 + $0x20] sm:$0xf]
    %v249 = vld [vmem:[#allocation2 + $0x24] sm:$0xf]
    %v250 = vld [vmem:[#allocation2 + $0x28] sm:$0xf]
    %v251 = vld [vmem:[#allocation2 + $0x2c] sm:$0xf]
    %v252 = vld [vmem:[#allocation2 + $0x30] sm:$0xf]
    %v253 = vld [vmem:[#allocation2 + $0x34] sm:$0xf]
    %v254 = vld [vmem:[#allocation2 + $0x38] sm:$0xf]
    %v255 = vld [vmem:[#allocation2 + $0x3c] sm:$0xf]
    %v256 = vld [vmem:[%s4] sm:$0x1]
    %v258 = vlaneseq
    %v259 = vshrl.u32 %v258, 7
    %v260 = vsub.s32 0, %v259
    %v261 = vrot.slane %v256, %v260
    %v279 = vunpack.c.l.b16 %v240
    %v280 = vunpack.c.l.b16 %v241
    %v281 = vunpack.c.l.b16 %v242
    %v282 = vunpack.c.l.b16 %v243
    %v283 = vunpack.c.l.b16 %v244
    %v284 = vunpack.c.l.b16 %v245
    %v285 = vunpack.c.l.b16 %v246
    %v286 = vunpack.c.l.b16 %v247
    %v287 = vunpack.c.l.b16 %v248
    %v288 = vunpack.c.l.b16 %v249
    %v289 = vunpack.c.l.b16 %v250
    %v290 = vunpack.c.l.b16 %v251
    %v291 = vunpack.c.l.b16 %v252
    %v292 = vunpack.c.l.b16 %v253
    %v293 = vunpack.c.l.b16 %v254
    %v294 = vunpack.c.l.b16 %v255
    %v295 = vpack.c.b16 %v280, %v279
    %v296 = vpack.c.b16 %v282, %v281
    %v297 = vpack.c.b16 %v284, %v283
    %v298 = vpack.c.b16 %v286, %v285
    %v299 = vpack.c.b16 %v288, %v287
    %v300 = vpack.c.b16 %v290, %v289
    %v301 = vpack.c.b16 %v292, %v291
    %v302 = vpack.c.b16 %v294, %v293
    %311 = vmatprep.subr.bf16.mxu0 0
    %312 = vmatpush1.bf16.msra.mxu0 %v295
    %313 = vmatprep.subr.bf16.mxu0 0
    %314 = vmatpush1.bf16.msra.mxu0 %v296
    %315 = vmatprep.subr.bf16.mxu0 0
    %316 = vmatpush1.bf16.msra.mxu0 %v297
    %317 = vmatprep.subr.bf16.mxu0 0
    %318 = vmatpush1.bf16.msra.mxu0 %v298
    %319 = vmatprep.subr.bf16.mxu0 0
    %320 = vmatpush1.bf16.msra.mxu0 %v299
    %321 = vmatprep.subr.bf16.mxu0 0
    %322 = vmatpush1.bf16.msra.mxu0 %v300
    %323 = vmatprep.subr.bf16.mxu0 0
    %324 = vmatpush1.bf16.msra.mxu0 %v301
    %325 = vmatprep.subr.bf16.mxu0 0
    %326 = vmatpush1.bf16.msra.mxu0 %v302
    %327 = vmatprep.subr.bf16.mxu0 0
    %328 = vmatpush1.bf16.msra.mxu0 0
    %329 = vmatprep.subr.bf16.mxu0 0
    %330 = vmatpush1.bf16.msra.mxu0 0
    %331 = vmatprep.subr.bf16.mxu0 0
    %332 = vmatpush1.bf16.msra.mxu0 0
    %333 = vmatprep.subr.bf16.mxu0 0
    %334 = vmatpush1.bf16.msra.mxu0 0
    %335 = vmatprep.subr.bf16.mxu0 0
    %336 = vmatpush1.bf16.msra.mxu0 0
    %337 = vmatprep.subr.bf16.mxu0 0
    %338 = vmatpush1.bf16.msra.mxu0 0
    %339 = vmatprep.subr.bf16.mxu0 0
    %340 = vmatpush1.bf16.msra.mxu0 0
    %341 = vmatprep.subr.bf16.mxu0 0
    %342 = vmatpush1.bf16.msra.mxu0 0
    %343 = vmatprep.mubr.bf16.mxu0 0
    %344 = vmatmul.mubr.bf16.gmra.mrb[0].mxu0 %v239
    %v345 = vpop.f32.mrb[0].mxu0
    %v346 = vadd.f32 %v261, %v345
    %v347 = vpop.f32.mrb[0].mxu0
    %v348 = vpop.f32.mrb[0].mxu0
    %v349 = vadd.f32 %v261, %v348
    %v350 = vpop.f32.mrb[0].mxu0
    %351 = vdwg.mxu0
    %v352 = vmax.f32 %v346, 0.0
    %v353 = vmax.f32 %v349, 0.0
    %v354 = vpack.c.bf16 %v353, %v352
    %v355 = vld [vmem:[#allocation4] sm:$0xf]
    %v356 = vld [vmem:[#allocation4 + $0x4] sm:$0xf]
    %v357 = vld [vmem:[#allocation4 + $0x8] sm:$0xf]
    %v358 = vld [vmem:[#allocation4 + $0xc] sm:$0xf]
    %v359 = vld [vmem:[#allocation4 + $0x10] sm:$0xf]
    %v360 = vld [vmem:[#allocation4 + $0x14] sm:$0xf]
    %v361 = vld [vmem:[#allocation4 + $0x18] sm:$0xf]
    %v362 = vld [vmem:[#allocation4 + $0x1c] sm:$0xf]
    %v363 = vld [vmem:[#allocation4 + $0x20] sm:$0xf]
    %v364 = vld [vmem:[#allocation4 + $0x24] sm:$0xf]
    %v365 = vld [vmem:[#allocation4 + $0x28] sm:$0xf]
    %v366 = vld [vmem:[#allocation4 + $0x2c] sm:$0xf]
    %v367 = vld [vmem:[#allocation4 + $0x30] sm:$0xf]
    %v368 = vld [vmem:[#allocation4 + $0x34] sm:$0xf]
    %v369 = vld [vmem:[#allocation4 + $0x38] sm:$0xf]
    %v370 = vld [vmem:[#allocation4 + $0x3c] sm:$0xf]
    %v371 = vld [vmem:[%s6] sm:$0x1]
    %v373 = vlaneseq
    %v374 = vshrl.u32 %v373, 7
    %v375 = vsub.s32 0, %v374
    %v376 = vrot.slane %v371, %v375
    %v394 = vunpack.c.l.b16 %v355
    %v395 = vunpack.c.l.b16 %v356
    %v396 = vunpack.c.l.b16 %v357
    %v397 = vunpack.c.l.b16 %v358
    %v398 = vunpack.c.l.b16 %v359
    %v399 = vunpack.c.l.b16 %v360
    %v400 = vunpack.c.l.b16 %v361
    %v401 = vunpack.c.l.b16 %v362
    %v402 = vunpack.c.l.b16 %v363
    %v403 = vunpack.c.l.b16 %v364
    %v404 = vunpack.c.l.b16 %v365
    %v405 = vunpack.c.l.b16 %v366
    %v406 = vunpack.c.l.b16 %v367
    %v407 = vunpack.c.l.b16 %v368
    %v408 = vunpack.c.l.b16 %v369
    %v409 = vunpack.c.l.b16 %v370
    %v410 = vpack.c.b16 %v395, %v394
    %v411 = vpack.c.b16 %v397, %v396
    %v412 = vpack.c.b16 %v399, %v398
    %v413 = vpack.c.b16 %v401, %v400
    %v414 = vpack.c.b16 %v403, %v402
    %v415 = vpack.c.b16 %v405, %v404
    %v416 = vpack.c.b16 %v407, %v406
    %v417 = vpack.c.b16 %v409, %v408
    %426 = vmatprep.subr.bf16.mxu0 0
    %427 = vmatpush1.bf16.msra.mxu0 %v410
    %428 = vmatprep.subr.bf16.mxu0 0
    %429 = vmatpush1.bf16.msra.mxu0 %v411
    %430 = vmatprep.subr.bf16.mxu0 0
    %431 = vmatpush1.bf16.msra.mxu0 %v412
    %432 = vmatprep.subr.bf16.mxu0 0
    %433 = vmatpush1.bf16.msra.mxu0 %v413
    %434 = vmatprep.subr.bf16.mxu0 0
    %435 = vmatpush1.bf16.msra.mxu0 %v414
    %436 = vmatprep.subr.bf16.mxu0 0
    %437 = vmatpush1.bf16.msra.mxu0 %v415
    %438 = vmatprep.subr.bf16.mxu0 0
    %439 = vmatpush1.bf16.msra.mxu0 %v416
    %440 = vmatprep.subr.bf16.mxu0 0
    %441 = vmatpush1.bf16.msra.mxu0 %v417
    %442 = vmatprep.subr.bf16.mxu0 0
    %443 = vmatpush1.bf16.msra.mxu0 0
    %444 = vmatprep.subr.bf16.mxu0 0
    %445 = vmatpush1.bf16.msra.mxu0 0
    %446 = vmatprep.subr.bf16.mxu0 0
    %447 = vmatpush1.bf16.msra.mxu0 0
    %448 = vmatprep.subr.bf16.mxu0 0
    %449 = vmatpush1.bf16.msra.mxu0 0
    %450 = vmatprep.subr.bf16.mxu0 0
    %451 = vmatpush1.bf16.msra.mxu0 0
    %452 = vmatprep.subr.bf16.mxu0 0
    %453 = vmatpush1.bf16.msra.mxu0 0
    %454 = vmatprep.subr.bf16.mxu0 0
    %455 = vmatpush1.bf16.msra.mxu0 0
    %456 = vmatprep.subr.bf16.mxu0 0
    %457 = vmatpush1.bf16.msra.mxu0 0
    %458 = vmatprep.mubr.bf16.mxu0 0
    %459 = vmatmul.mubr.bf16.gmra.mrb[0].mxu0 %v354
    %v460 = vpop.f32.mrb[0].mxu0
    %v461 = vadd.f32 %v376, %v460
    %v462 = vpop.f32.mrb[0].mxu0
    %v463 = vpop.f32.mrb[0].mxu0
    %v464 = vadd.f32 %v376, %v463
    %v465 = vpop.f32.mrb[0].mxu0
    %466 = vdwg.mxu0
    %467 = vmax.xlane.f32.xlu0 %v461
    %v468 = vpop.xlane.xlu0 %467
    %469 = vmax.xlane.f32.xlu0 %v464
    %v470 = vpop.xlane.xlu0 %469
    %v471 = vsub.f32 %v461, %v468
    %v472 = vsub.f32 %v464, %v470
    %v473 = vmul.f32 %v471, 1.442695
    %v474 = vpow.pop %v473
    %v475 = vmul.f32 %v472, 1.442695
    %v476 = vpow.pop %v475
    %477 = vadd.xlane.f32.xlu0 %v474
    %v478 = vpop.xlane.xlu0 %477
    %479 = vadd.xlane.f32.xlu0 %v476
    %v480 = vpop.xlane.xlu0 %479
    %v481 = vlog2.pop %v478
    %v482 = vmul.f32 %v481, 0.6931472
    %v483 = vlog2.pop %v480
    %v484 = vmul.f32 %v483, 0.6931472
    %v485 = vsub.f32 %v471, %v482
    %v486 = vsub.f32 %v472, %v484
    %v487 = vpack.c.bf16 %v486, %v485
    %v489 = vunpack.c.l.b16 %v487
    %v490 = vunpack.c.h.b16 %v487
    %v491 = vpack.c.b16 %v489, %v489
    %v492 = vpack.c.b16 %v490, %v490
    %495 = vst [vmem:[%s7] sm:$0xf] %v491
    %496 = vst [vmem:[%s7 + $0x4] sm:$0xf] %v492
    // Predicated region
    $region38: #{model_c_forward.1} parent=1 // pred_check
      _
    $region39: #{model_c_forward.1} parent=1 // pred_check_branch
      %498 = sbr.rel (0) target = $region41
    $region40: #{model_c_forward.1} parent=1 // pred_region
      _
    $region41: #{model_c_forward.1} parent=1 // pred_fallthru
      _
    // Predicated region
    $region42: #{model_c_forward.1} parent=1 // pred_check
      _
    $region43: #{model_c_forward.1} parent=1 // pred_check_branch
      %500 = sbr.rel (0) target = $region45
    $region44: #{model_c_forward.1} parent=1 // pred_region
      _
    $region45: #{model_c_forward.1} parent=1 // pred_fallthru
      _
    %501 = vsyncpa [#allocation3], 1
    %502 = vsyncpa [#allocation5], 1

</llo_original>
